<compile_context>
chip_gen: v5e
topology: v5e:2x2
jax: 0.10.0
libtpu: 0.0.40
codegen_flags: <defaults>
</compile_context>

<pallas_src>
import functools

import jax
import jax.numpy as jnp
from jax import lax
from jax.experimental import pallas as pl
from jax.experimental.pallas import tpu as pltpu

LANE = 128                     # one vreg lane width; q/k/v slot size
HIGHEST = lax.Precision.HIGHEST


def _attn_kernel(x_ref, wqkv_ref, bqkv_ref, o_ref):
    # x_ref: (S, D), wqkv_ref: (D, 3*LANE), bqkv_ref: (1, 3*LANE), o_ref: (S, LANE)
    x = x_ref[...]

    # One fused projection; q slot already carries the 1/inv_scale_factor fold.
    qkv = jnp.dot(x, wqkv_ref[...],
                  preferred_element_type=jnp.float32,
                  precision=HIGHEST) + bqkv_ref[...]
    q = qkv[:, 0 * LANE:1 * LANE]          # (S, LANE), lane-aligned slice
    k = qkv[:, 1 * LANE:2 * LANE]
    v = qkv[:, 2 * LANE:3 * LANE]

    # scaled_qk = (q @ k.T) / inv_scale_factor (scale folded into q slot).
    # Padded columns of q and k are zero, so they contribute nothing.
    s = lax.dot_general(q, k,
                        dimension_numbers=(((1,), (1,)), ((), ())),
                        preferred_element_type=jnp.float32,
                        precision=HIGHEST)                       # (S, S)

    # Numerically-stable softmax; exact divide (a VALU div is free here and
    # avoids the approximate-reciprocal error that tripped the check before).
    m = jnp.max(s, axis=-1, keepdims=True)
    e = jnp.exp(s - m)
    denom = jnp.sum(e, axis=-1, keepdims=True)

    # TODO(synk): torch.nn.Dropout(p=1) in *training* mode would zero the
    # probabilities; eval/inference semantics (identity) are implemented here.

    pv = jnp.dot(e, v, preferred_element_type=jnp.float32, precision=HIGHEST)
    o_ref[...] = pv / denom                # (S, LANE) full-lane unmasked store


def prepare_qkv_params(wq, bq, wk, bk, wv, bv, inv_scale_factor):
    """One-time fusion of the three Linear layers into a padded (D, 3*128)
    weight + (1, 3*128) bias, with 1/inv_scale_factor folded into the q slot.
    Call once outside the hot path."""
    D = wq.shape[0]
    recip = 1.0 / float(inv_scale_factor)

    def slot(w, b, scale):
        wp = jnp.zeros((D, LANE), jnp.float32).at[:, :D].set(w.T * scale)
        bp = jnp.zeros((LANE,), jnp.float32).at[:D].set(b * scale)
        return wp, bp

    wq_p, bq_p = slot(wq, bq, recip)
    wk_p, bk_p = slot(wk, bk, 1.0)
    wv_p, bv_p = slot(wv, bv, 1.0)
    w_qkv = jnp.concatenate([wq_p, wk_p, wv_p], axis=1)            # (D, 3*LANE)
    b_qkv = jnp.concatenate([bq_p, bk_p, bv_p]).reshape(1, 3 * LANE)
    return w_qkv, b_qkv


@jax.jit
def attention_forward(x, w_qkv, b_qkv):
    """x: (B, S, D) f32 — B independent attention problems per call."""
    B, S, D = x.shape

    flops = B * (2 * S * D * (3 * LANE) + 2 * S * S * LANE + 2 * S * S * LANE)
    bytes_accessed = (x.size + w_qkv.size + b_qkv.size + B * S * LANE) * 4
    cost = pl.CostEstimate(flops=flops,
                           transcendentals=B * S * S,
                           bytes_accessed=bytes_accessed)

    out_pad = pl.pallas_call(
        _attn_kernel,
        out_shape=jax.ShapeDtypeStruct((B, S, LANE), jnp.float32),
        grid=(B,),
        in_specs=[
            pl.BlockSpec((None, S, D), lambda b: (b, 0, 0)),       # x slab
            pl.BlockSpec((D, 3 * LANE), lambda b: (0, 0)),         # fused W
            pl.BlockSpec((1, 3 * LANE), lambda b: (0, 0)),         # fused bias
        ],
        out_specs=pl.BlockSpec((None, S, LANE), lambda b: (b, 0, 0)),
        compiler_params=pltpu.CompilerParams(
            dimension_semantics=("parallel",)),
        cost_estimate=cost,
    )(x, w_qkv, b_qkv)

    # Lane-dense kernel store; slice the D valid columns outside the kernel
    # (layout plumbing, trivially cheap at these sizes).
    return out_pad[:, :, :D]


def reference_forward(x, wq, bq, wk, bk, wv, bv, inv_scale_factor):
    q = jnp.matmul(x, wq.T, precision=HIGHEST) + bq
    k = jnp.matmul(x, wk.T, precision=HIGHEST) + bk
    v = jnp.matmul(x, wv.T, precision=HIGHEST) + bv
    qk = jnp.matmul(q, jnp.swapaxes(k, -1, -2), precision=HIGHEST)
    p = jax.nn.softmax(qk / inv_scale_factor, axis=-1)
    return jnp.matmul(p, v, precision=HIGHEST)


if __name__ == "__main__":
    # Small shapes consistent with the module (single head, seq x features),
    # batched over B independent problems to amortize launch overhead.
    B, S, D = 4, 8, 32
    inv_scale_factor = 2.0

    key = jax.random.PRNGKey(0)
    kx, kwq, kbq, kwk, kbk, kwv, kbv = jax.random.split(key, 7)

    x = jax.random.normal(kx, (B, S, D), dtype=jnp.float32)
    lim = 1.0 / float(jnp.sqrt(D))
    wq = jax.random.uniform(kwq, (D, D), jnp.float32, -lim, lim)
    bq = jax.random.uniform(kbq, (D,), jnp.float32, -lim, lim)
    wk = jax.random.uniform(kwk, (D, D), jnp.float32, -lim, lim)
    bk = jax.random.uniform(kbk, (D,), jnp.float32, -lim, lim)
    wv = jax.random.uniform(kwv, (D, D), jnp.float32, -lim, lim)
    bv = jax.random.uniform(kbv, (D,), jnp.float32, -lim, lim)

    # Hoisted out of the hot path: done once.
    w_qkv, b_qkv = prepare_qkv_params(wq, bq, wk, bk, wv, bv, inv_scale_factor)
    w_qkv, b_qkv = jax.block_until_ready((w_qkv, b_qkv))

    out = attention_forward(x, w_qkv, b_qkv)
    out = jax.block_until_ready(out)

    ref = reference_forward(x, wq, bq, wk, bk, wv, bv, inv_scale_factor)
    ref = jax.block_until_ready(ref)

    assert out.shape == (B, S, D)
    assert jnp.allclose(out, ref, atol=1e-3, rtol=1e-3), (
        "mismatch vs reference: max abs diff = "
        f"{float(jnp.max(jnp.abs(out - ref)))}")

    print("KERNEL_OK")
</pallas_src>

<mosaic_0001>
module attributes {stable_mosaic.version = 11 : i64} {
  func.func @_attn_kernel(%arg0: i32, %arg1: memref<1x8x32xf32, #tpu.memory_space<vmem>>, %arg2: memref<32x384xf32, #tpu.memory_space<vmem>>, %arg3: memref<1x384xf32, #tpu.memory_space<vmem>>, %arg4: memref<1x8x128xf32, #tpu.memory_space<vmem>>) attributes {dimension_semantics = [#tpu.dimension_semantics<parallel>], iteration_bounds = array<i64: 4>, scalar_prefetch = 0 : i64, scratch_operands = 0 : i64, tpu.core_type = #tpu.core_type<tc>, window_params = [{transform_indices = @transform_0, window_bounds = array<i64: 1, 8, 32>}, {pipeline_mode = #tpu.pipeline_mode<synchronous>, transform_indices = @transform_1, window_bounds = array<i64: 32, 384>}, {pipeline_mode = #tpu.pipeline_mode<synchronous>, transform_indices = @transform_2, window_bounds = array<i64: 1, 384>}, {transform_indices = @transform_3, window_bounds = array<i64: 1, 8, 128>}]} {
    %c0 = arith.constant 0 : index
    %c0_0 = arith.constant 0 : index
    %c0_1 = arith.constant 0 : index
    %0 = vector.load %arg1[%c0, %c0_0, %c0_1] : memref<1x8x32xf32, #tpu.memory_space<vmem>>, vector<1x8x32xf32>
    %1 = vector.shape_cast %0 : vector<1x8x32xf32> to vector<8x32xf32>
    %c0_2 = arith.constant 0 : index
    %c0_3 = arith.constant 0 : index
    %2 = vector.load %arg2[%c0_2, %c0_3] : memref<32x384xf32, #tpu.memory_space<vmem>>, vector<32x384xf32>
    %cst = arith.constant dense<0.000000e+00> : vector<8x384xf32>
    %3 = tpu.matmul %1, %2, %cst {dimension_numbers = #tpu.dot_dimension_numbers<[1], [0], [0], [1], [0, 0, 1, 1], [], []>, precision = #tpu.contract_precision<fp32>} : vector<8x32xf32>, vector<32x384xf32>, vector<8x384xf32> -> vector<8x384xf32>
    %c0_4 = arith.constant 0 : index
    %c0_5 = arith.constant 0 : index
    %4 = vector.load %arg3[%c0_4, %c0_5] : memref<1x384xf32, #tpu.memory_space<vmem>>, vector<1x384xf32>
    %5 = vector.broadcast %4 : vector<1x384xf32> to vector<8x384xf32>
    %6 = arith.addf %3, %5 : vector<8x384xf32>
    %7 = vector.extract_strided_slice %6 {offsets = [0, 0], sizes = [8, 128], strides = [1, 1]} : vector<8x384xf32> to vector<8x128xf32>
    %8 = vector.extract_strided_slice %6 {offsets = [0, 128], sizes = [8, 128], strides = [1, 1]} : vector<8x384xf32> to vector<8x128xf32>
    %9 = vector.extract_strided_slice %6 {offsets = [0, 256], sizes = [8, 128], strides = [1, 1]} : vector<8x384xf32> to vector<8x128xf32>
    %cst_6 = arith.constant dense<0.000000e+00> : vector<8x8xf32>
    %10 = tpu.matmul %7, %8, %cst_6 {dimension_numbers = #tpu.dot_dimension_numbers<[1], [1], [0], [0], [0, 0, 1, 0], [], []>, precision = #tpu.contract_precision<fp32>} : vector<8x128xf32>, vector<8x128xf32>, vector<8x8xf32> -> vector<8x8xf32>
    %cst_7 = arith.constant dense<0xFF800000> : vector<8xf32>
    %11 = vector.multi_reduction <maximumf>, %10, %cst_7 [1] : vector<8x8xf32> to vector<8xf32>
    %12 = vector.shape_cast %11 : vector<8xf32> to vector<8x1xf32>
    %13 = vector.broadcast %12 : vector<8x1xf32> to vector<8x8xf32>
    %14 = arith.subf %10, %13 : vector<8x8xf32>
    %15 = math.exp %14 : vector<8x8xf32>
    %cst_8 = arith.constant dense<0.000000e+00> : vector<8xf32>
    %16 = vector.multi_reduction <add>, %15, %cst_8 [1] : vector<8x8xf32> to vector<8xf32>
    %17 = vector.shape_cast %16 : vector<8xf32> to vector<8x1xf32>
    %cst_9 = arith.constant dense<0.000000e+00> : vector<8x128xf32>
    %18 = tpu.matmul %15, %9, %cst_9 {dimension_numbers = #tpu.dot_dimension_numbers<[1], [0], [0], [1], [0, 0, 1, 1], [], []>, precision = #tpu.contract_precision<fp32>} : vector<8x8xf32>, vector<8x128xf32>, vector<8x128xf32> -> vector<8x128xf32>
    %19 = vector.broadcast %17 : vector<8x1xf32> to vector<8x128xf32>
    %20 = arith.divf %18, %19 : vector<8x128xf32>
    %c0_10 = arith.constant 0 : index
    %c0_11 = arith.constant 0 : index
    %c0_12 = arith.constant 0 : index
    %21 = vector.load %arg4[%c0_10, %c0_11, %c0_12] : memref<1x8x128xf32, #tpu.memory_space<vmem>>, vector<1x8x128xf32>
    %22 = vector.shape_cast %21 : vector<1x8x128xf32> to vector<8x128xf32>
    %23 = vector.shape_cast %20 : vector<8x128xf32> to vector<1x8x128xf32>
    tpu.vector_store %arg4[%c0_10, %c0_11, %c0_12], %23 {strides = array<i32>} : memref<1x8x128xf32, #tpu.memory_space<vmem>>, vector<1x8x128xf32>,
    return
  }
  func.func @transform_0(%arg0: i32) -> (i32, i32, i32) {
    %c0_i32 = arith.constant 0 : i32
    %c0_i32_0 = arith.constant 0 : i32
    %c0_i32_1 = arith.constant 0 : i32
    return %arg0, %c0_i32, %c0_i32_0 : i32, i32, i32
  }
  func.func @transform_1(%arg0: i32) -> (i32, i32) {
    %c0_i32 = arith.constant 0 : i32
    %c0_i32_0 = arith.constant 0 : i32
    %c0_i32_1 = arith.constant 0 : i32
    return %c0_i32, %c0_i32_0 : i32, i32
  }
  func.func @transform_2(%arg0: i32) -> (i32, i32) {
    %c0_i32 = arith.constant 0 : i32
    %c0_i32_0 = arith.constant 0 : i32
    %c0_i32_1 = arith.constant 0 : i32
    return %c0_i32, %c0_i32_0 : i32, i32
  }
  func.func @transform_3(%arg0: i32) -> (i32, i32, i32) {
    %c0_i32 = arith.constant 0 : i32
    %c0_i32_0 = arith.constant 0 : i32
    %c0_i32_1 = arith.constant 0 : i32
    return %arg0, %c0_i32, %c0_i32_0 : i32, i32, i32
  }
}

</mosaic_0001>

<llo_original>
// kernel: attention_forward.1
$region0: #{attention_forward.1}
  #allocation0 [shape = 'u32[]', space=smem, size = 0x4, offset = 0x4, fixed_abs, tag = 'smem constant byte address 0x4 - core index']
  #allocation1 [shape = 'u32[72,128]{1,0:T(1,128)}', space=vmem, size = 0x9000, scoped, tag = 'internal scratch']
  %s0 = inlined_call_operand.hbm [shape: f32[4,8,32], index: 0, kind: input, shape index: {}]
  %s1 = inlined_call_operand.hbm [shape: f32[32,384], index: 1, kind: input, shape index: {}]
  %s2 = inlined_call_operand.hbm [shape: f32[1,384], index: 2, kind: input, shape index: {}]
  %s3 = inlined_call_operand.hbm [shape: f32[4,8,128], index: 3, kind: output, shape index: {}]
  %s4 = sld [smem:[#allocation0]]
  $region57: #{attention_forward.1} parent=0
    _
  %s6 = ssub.s32 1, %s4
  %s7 = scalar_select 0, %s6, %s4
  $region1: #{attention_forward.1} parent=0
    #allocation2 [shape = 'u8[8192]{0}', space=vmem, size = 0x2000, scoped, tag = 'input window, operand 0']
    #allocation3 [shape = 's32[2]{0}', space=sflag, size = 0x8, scoped, tag = 'scoped memory for attention_forward.1']
    #allocation4 [shape = 's32[2]{0}', space=sflag, size = 0x8, scoped, tag = 'scoped memory for attention_forward.1']
    #allocation5 [shape = 'u8[49152]{0}', space=vmem, size = 0xc000, scoped, tag = 'input window, operand 1, single buffered']
    #allocation6 [shape = 's32[1]{0}', space=sflag, size = 0x4, scoped, tag = 'scoped memory for attention_forward.1']
    #allocation7 [shape = 'u8[1536]{0}', space=vmem, size = 0x800, scoped, tag = 'input window, operand 2, single buffered']
    #allocation8 [shape = 'u8[8192]{0}', space=vmem, size = 0x2000, scoped, tag = 'output window, operand 0']
    %8 = vsyncpa [#allocation3], 0
    %s9 = scalar_lea.sflag [#allocation3], 1
    %10 = vsyncpa %s9, 0
    %11 = vsyncpa [#allocation6], 0
    %12 = vsyncpa [#allocation4], 0
    %s13 = scalar_lea.sflag [#allocation4], 1
    %14 = vsyncpa %s13, 0
    loop: start=0, step=1, limit=6
    $region2: #{attention_forward.1} parent=1 // loop_pre_header
      _
    $region3: #{attention_forward.1} parent=1 // loop_header
      %s16 = sphi 0, %s20
      %p17 = scmp.ge.s32.totalorder %s16, 6
      %s26 = sphi 0, %s28
      %s29 = sphi 0, %s26
      %s30 = sphi 0, %s29
      %s46 = sphi 0, %s30
      %s50 = sphi 0, %s50
      %s52 = sphi 0, %s50
      %s53 = sphi 0, %s52
      %s67 = sphi 0, %s53
      %s71 = sphi 0, %s71
      %s73 = sphi 0, %s71
      %s74 = sphi 0, %s73
      %s88 = sphi 0, %s74
      %s94 = sphi 0, %s96
      %s97 = sphi 0, %s94
      %s98 = sphi 0, %s97
      %s114 = sphi 0, %s98
    $region4: #{attention_forward.1} parent=1 // loop_header_branch
      %19 = sbr.rel (%p17) target = $region8
    $region5: #{attention_forward.1} parent=1 // loop_body
      %s21 = ssub.s32 %s16, 1
      %s22 = ssub.s32 %s16, 2
      %s23 = sadd.s32 %s16, 1
      %s24 = ssub.s32 %s16, %s23
      %p25 = scmp.eq.s32.totalorder %s24, 0
      %s27 = sadd.s32 %s26, 1
      %s28 = scalar_select %p25, %s26, %s27
      %p31 = pneg %p25
      %p32 = scmp.eq.s32.totalorder %s16, 3
      %p33 = por %p31, %p32
      %p34 = scmp.ne.s32.totalorder %s26, %s29
      %p35 = scmp.eq.s32.totalorder %s16, 0
      %p36 = por %p34, %p35
      %p37 = scmp.ne.s32.totalorder %s26, %s29
      %p38 = scmp.eq.s32.totalorder %s21, 3
      %p39 = por %p37, %p38
      %p40 = scmp.ne.s32.totalorder %s29, %s30
      %p41 = scmp.eq.s32.totalorder %s21, 0
      %p42 = por %p40, %p41
      %p43 = scmp.ne.s32.totalorder %s29, %s30
      %p44 = scmp.eq.s32.totalorder %s22, 3
      %p45 = por %p43, %p44
      %p47 = scmp.ne.s32.totalorder %s30, %s46
      %p48 = scmp.eq.s32.totalorder %s22, 0
      %p49 = por %p47, %p48
      %s51 = sadd.s32 %s50, 1
      %p54 = scmp.eq.s32.totalorder %s16, 3
      %p55 = scmp.ne.s32.totalorder %s50, %s52
      %p56 = scmp.eq.s32.totalorder %s16, 0
      %p57 = por %p55, %p56
      %p58 = scmp.ne.s32.totalorder %s50, %s52
      %p59 = scmp.eq.s32.totalorder %s21, 3
      %p60 = por %p58, %p59
      %p61 = scmp.ne.s32.totalorder %s52, %s53
      %p62 = scmp.eq.s32.totalorder %s21, 0
      %p63 = por %p61, %p62
      %p64 = scmp.ne.s32.totalorder %s52, %s53
      %p65 = scmp.eq.s32.totalorder %s22, 3
      %p66 = por %p64, %p65
      %p68 = scmp.ne.s32.totalorder %s53, %s67
      %p69 = scmp.eq.s32.totalorder %s22, 0
      %p70 = por %p68, %p69
      %s72 = sadd.s32 %s71, 1
      %p75 = scmp.eq.s32.totalorder %s16, 3
      %p76 = scmp.ne.s32.totalorder %s71, %s73
      %p77 = scmp.eq.s32.totalorder %s16, 0
      %p78 = por %p76, %p77
      %p79 = scmp.ne.s32.totalorder %s71, %s73
      %p80 = scmp.eq.s32.totalorder %s21, 3
      %p81 = por %p79, %p80
      %p82 = scmp.ne.s32.totalorder %s73, %s74
      %p83 = scmp.eq.s32.totalorder %s21, 0
      %p84 = por %p82, %p83
      %p85 = scmp.ne.s32.totalorder %s73, %s74
      %p86 = scmp.eq.s32.totalorder %s22, 3
      %p87 = por %p85, %p86
      %p89 = scmp.ne.s32.totalorder %s74, %s88
      %p90 = scmp.eq.s32.totalorder %s22, 0
      %p91 = por %p89, %p90
      %s92 = ssub.s32 %s16, %s23
      %p93 = scmp.eq.s32.totalorder %s92, 0
      %s95 = sadd.s32 %s94, 1
      %s96 = scalar_select %p93, %s94, %s95
      %p99 = pneg %p93
      %p100 = scmp.eq.s32.totalorder %s16, 3
      %p101 = por %p99, %p100
      %p102 = scmp.ne.s32.totalorder %s94, %s97
      %p103 = scmp.eq.s32.totalorder %s16, 0
      %p104 = por %p102, %p103
      %p105 = scmp.ne.s32.totalorder %s94, %s97
      %p106 = scmp.eq.s32.totalorder %s21, 3
      %p107 = por %p105, %p106
      %p108 = scmp.ne.s32.totalorder %s97, %s98
      %p109 = scmp.eq.s32.totalorder %s21, 0
      %p110 = por %p108, %p109
      %p111 = scmp.ne.s32.totalorder %s97, %s98
      %p112 = scmp.eq.s32.totalorder %s22, 3
      %p113 = por %p111, %p112
      %p115 = scmp.ne.s32.totalorder %s98, %s114
      %p116 = scmp.eq.s32.totalorder %s22, 0
      %p117 = por %p115, %p116
      %p118 = scmp.le.s32.totalorder 1, %s16
      %p119 = scmp.lt.s32.totalorder %s16, 5
      %p120 = pnand %p118, %p119
      %p121 = pneg %p120
      // Predicated region
      $region9: #{attention_forward.1} parent=5 // pred_check
        _
      $region10: #{attention_forward.1} parent=5 // pred_check_branch
        %123 = sbr.rel (%p120) target = $region12
      $region11: #{attention_forward.1} parent=5 // pred_region
        %s124 = ssub.s32 %s16, 1
        // Predicated region
        $region13: #{attention_forward.1} parent=11 // pred_check
          %p125 = pneg %p63
        $region14: #{attention_forward.1} parent=11 // pred_check_branch
          %127 = sbr.rel (%p125) target = $region16
        $region15: #{attention_forward.1} parent=11 // pred_region
          %129 = vsyncadd [#allocation6], 0
          %s130 = sshll.u32 %s1, 4
          %s131 = int_to_ptr.hbm [resolvable:$true] %s130
          %s132 = sshll.u32 [#allocation5], 4
          %s133 = int_to_ptr.vmem [resolvable:$true] %s132
          %138 = dma.hbm_to_vmem [thread:$0]  %s131, 1536, %s133, [#allocation6], 384, 384, 24
        $region16: #{attention_forward.1} parent=11 // pred_fallthru
          _
        // Predicated region
        $region17: #{attention_forward.1} parent=11 // pred_check
          %p139 = pneg %p84
        $region18: #{attention_forward.1} parent=11 // pred_check_branch
          %141 = sbr.rel (%p139) target = $region20
        $region19: #{attention_forward.1} parent=11 // pred_region
          %143 = vsyncadd [#allocation6], 0
          %s145 = sshll.u32 %s2, 4
          %s146 = int_to_ptr.hbm [resolvable:$true] %s145
          %s147 = sshll.u32 [#allocation7], 4
          %s148 = int_to_ptr.vmem [resolvable:$true] %s147
          %150 = dma.hbm_to_vmem [thread:$0]  %s146, 48, %s148, [#allocation6]
        $region20: #{attention_forward.1} parent=11 // pred_fallthru
          _
      $region12: #{attention_forward.1} parent=5 // pred_fallthru
        _
      %p151 = scmp.lt.s32.totalorder %s16, 4
      // Predicated region
      $region21: #{attention_forward.1} parent=5 // pred_check
        %p152 = pneg %p151
      $region22: #{attention_forward.1} parent=5 // pred_check_branch
        %154 = sbr.rel (%p152) target = $region24
      $region23: #{attention_forward.1} parent=5 // pred_region
        // Predicated region
        $region25: #{attention_forward.1} parent=23 // pred_check
          %p155 = pneg %p36
        $region26: #{attention_forward.1} parent=23 // pred_check_branch
          %157 = sbr.rel (%p155) target = $region28
        $region27: #{attention_forward.1} parent=23 // pred_region
          %s158 = sand.u32 %s26, 1
          %s159 = scalar_lea.sflag [#allocation3], %s158
          %s160 = sand.u32 %s26, 1
          %s161 = smul.addr %s160, 8
          %s162 = scalar_lea.vmem [#allocation2], %s161
          %164 = vsyncadd %s159, 0
          %s165 = smul.addr %s16, 8
          %s166 = scalar_lea.hbm %s0, %s165
          %s168 = sshll.u32 %s166, 4
          %s169 = int_to_ptr.hbm [resolvable:$true] %s168
          %s170 = sshll.u32 %s162, 4
          %s171 = int_to_ptr.vmem [resolvable:$true] %s170
          %173 = dma.hbm_to_vmem [thread:$0]  %s169, 128, %s171, %s159
        $region28: #{attention_forward.1} parent=23 // pred_fallthru
          _
      $region24: #{attention_forward.1} parent=5 // pred_fallthru
        _
      %p174 = scmp.le.s32.totalorder 1, %s16
      %p175 = scmp.lt.s32.totalorder %s16, 5
      %p176 = pnand %p174, %p175
      %p177 = pneg %p176
      // Predicated region
      $region29: #{attention_forward.1} parent=5 // pred_check
        _
      $region30: #{attention_forward.1} parent=5 // pred_check_branch
        %179 = sbr.rel (%p176) target = $region32
      $region31: #{attention_forward.1} parent=5 // pred_region
        %s180 = ssub.s32 %s16, 1
        %s181 = sand.u32 %s29, 1
        %s182 = scalar_lea.sflag [#allocation3], %s181
        %s183 = sand.u32 %s29, 1
        %s184 = smul.addr %s183, 8
        %s185 = scalar_lea.vmem [#allocation2], %s184
        // Predicated region
        $region33: #{attention_forward.1} parent=31 // pred_check
          %p186 = pneg %p42
        $region34: #{attention_forward.1} parent=31 // pred_check_branch
          %188 = sbr.rel (%p186) target = $region36
        $region35: #{attention_forward.1} parent=31 // pred_region
          %190 = dma.done %s182, 128
        $region36: #{attention_forward.1} parent=31 // pred_fallthru
          _
        // Predicated region
        $region37: #{attention_forward.1} parent=31 // pred_check
          %p191 = pneg %p63
        $region38: #{attention_forward.1} parent=31 // pred_check_branch
          %193 = sbr.rel (%p191) target = $region40
        $region39: #{attention_forward.1} parent=31 // pred_region
          %195 = dma.done [#allocation6], 1536
        $region40: #{attention_forward.1} parent=31 // pred_fallthru
          _
        // Predicated region
        $region41: #{attention_forward.1} parent=31 // pred_check
          %p196 = pneg %p84
        $region42: #{attention_forward.1} parent=31 // pred_check_branch
          %198 = sbr.rel (%p196) target = $region44
        $region43: #{attention_forward.1} parent=31 // pred_region
          %200 = dma.done [#allocation6], 48
        $region44: #{attention_forward.1} parent=31 // pred_fallthru
          _
        %s201 = sand.u32 %s29, 1
        %s202 = scalar_lea.sflag [#allocation3], %s201
        %s203 = sand.u32 %s29, 1
        %s204 = smul.addr %s203, 8
        %s205 = scalar_lea.vmem [#allocation2], %s204
        %p206 = pneg %p42
        %p207 = pneg %p39
        %p208 = pneg %p63
        %p209 = pneg %p60
        %p210 = pneg %p84
        %p211 = pneg %p81
        %p212 = pneg %p110
        %p213 = pneg %p107
        %s214 = sand.u32 %s97, 1
        %s215 = scalar_lea.sflag [#allocation4], %s214
        %s216 = sand.u32 %s97, 1
        %s217 = smul.addr %s216, 8
        %s218 = scalar_lea.vmem [#allocation8], %s217
        %v219 = vld [vmem:[%s185] sm:$0xff]
        %v220 = vld [vmem:[#allocation5] sm:$0xff]
        %v221 = vld [vmem:[#allocation5 + $0x8] sm:$0xff]
        %v222 = vld [vmem:[#allocation5 + $0x10] sm:$0xff]
        %v223 = vld [vmem:[#allocation5 + $0x18] sm:$0xff]
        %v224 = vld [vmem:[#allocation5 + $0x20] sm:$0xff]
        %v225 = vld [vmem:[#allocation5 + $0x28] sm:$0xff]
        %v226 = vld [vmem:[#allocation5 + $0x30] sm:$0xff]
        %v227 = vld [vmem:[#allocation5 + $0x38] sm:$0xff]
        %v228 = vld [vmem:[#allocation5 + $0x40] sm:$0xff]
        %v229 = vld [vmem:[#allocation5 + $0x48] sm:$0xff]
        %v230 = vld [vmem:[#allocation5 + $0x50] sm:$0xff]
        %v231 = vld [vmem:[#allocation5 + $0x58] sm:$0xff]
        %v232 = vld [vmem:[#allocation7] sm:$0x7]
        %v234 = vperm.slane %v232, 0
        %v235 = vperm.slane %v232, 1
        %v236 = vperm.slane %v232, 2
        %vm240 = vcmask 261120
        %v242 = vsel %vm240, %v219, 0
        %244 = vmatpush.msra.mxu0 0.0
        %245 = vmatpush.msra.mxu0 0.0
        %246 = vmatpush.msra.mxu0 0.0
        %247 = vmatpush.msra.mxu0 0.0
        %248 = vmatpush.msra.mxu0 0.0
        %249 = vmatpush.msra.mxu0 0.0
        %250 = vmatpush.msra.mxu0 0.0
        %251 = vmatpush.msra.mxu0 0.0
        %252 = vmatpush.msra.mxu0 0.0
        %253 = vmatpush.msra.mxu0 0.0
        %254 = vmatpush.msra.mxu0 0.0
        %255 = vmatpush.msra.mxu0 0.0
        %v256 = vand.u32 %v229, 4294901760
        %257 = vmatpush.msra.mxu0 %v256
        %v258 = vand.u32 %v226, 4294901760
        %259 = vmatpush.msra.mxu0 %v258
        %v260 = vand.u32 %v223, 4294901760
        %261 = vmatpush.msra.mxu0 %v260
        %v262 = vand.u32 %v220, 4294901760
        %263 = vmatpush.msra.mxu0 %v262
        %v264 = vand.u32 %v242, 4294901760
        %v265 = vsub.f32 %v242, %v264
        %v266 = vand.u32 %v265, 4294901760
        %v267 = vsub.f32 %v265, %v266
        %v268 = vand.u32 %v267, 4294901760
        %269 = vmatmul.f32.gmra.mxu0 %v268
        %v270 = vpop.f32.mrf.mxu0
        %v271 = vadd.f32 %v234, %v270
        %272 = vdwg.mxu0
        %273 = vmatpush.msra.mxu0 0.0
        %274 = vmatpush.msra.mxu0 0.0
        %275 = vmatpush.msra.mxu0 0.0
        %276 = vmatpush.msra.mxu0 0.0
        %277 = vmatpush.msra.mxu0 0.0
        %278 = vmatpush.msra.mxu0 0.0
        %279 = vmatpush.msra.mxu0 0.0
        %280 = vmatpush.msra.mxu0 0.0
        %281 = vmatpush.msra.mxu0 0.0
        %282 = vmatpush.msra.mxu0 0.0
        %283 = vmatpush.msra.mxu0 0.0
        %284 = vmatpush.msra.mxu0 0.0
        %v285 = vand.u32 %v229, 4294901760
        %v286 = vsub.f32 %v229, %v285
        %v287 = vand.u32 %v286, 4294901760
        %v288 = vsub.f32 %v286, %v287
        %v289 = vand.u32 %v288, 4294901760
        %290 = vmatpush.msra.mxu0 %v289
        %v291 = vand.u32 %v226, 4294901760
        %v292 = vsub.f32 %v226, %v291
        %v293 = vand.u32 %v292, 4294901760
        %v294 = vsub.f32 %v292, %v293
        %v295 = vand.u32 %v294, 4294901760
        %296 = vmatpush.msra.mxu0 %v295
        %v297 = vand.u32 %v223, 4294901760
        %v298 = vsub.f32 %v223, %v297
        %v299 = vand.u32 %v298, 4294901760
        %v300 = vsub.f32 %v298, %v299
        %v301 = vand.u32 %v300, 4294901760
        %302 = vmatpush.msra.mxu0 %v301
        %v303 = vand.u32 %v220, 4294901760
        %v304 = vsub.f32 %v220, %v303
        %v305 = vand.u32 %v304, 4294901760
        %v306 = vsub.f32 %v304, %v305
        %v307 = vand.u32 %v306, 4294901760
        %308 = vmatpush.msra.mxu0 %v307
        %v309 = vand.u32 %v242, 4294901760
        %310 = vmatmul.f32.gmra.mxu0 %v309
        %v311 = vpop.f32.mrf.mxu0
        %v312 = vadd.f32 %v271, %v311
        %313 = vdwg.mxu0
        %314 = vmatpush.msra.mxu0 0.0
        %315 = vmatpush.msra.mxu0 0.0
        %316 = vmatpush.msra.mxu0 0.0
        %317 = vmatpush.msra.mxu0 0.0
        %318 = vmatpush.msra.mxu0 0.0
        %319 = vmatpush.msra.mxu0 0.0
        %320 = vmatpush.msra.mxu0 0.0
        %321 = vmatpush.msra.mxu0 0.0
        %322 = vmatpush.msra.mxu0 0.0
        %323 = vmatpush.msra.mxu0 0.0
        %324 = vmatpush.msra.mxu0 0.0
        %325 = vmatpush.msra.mxu0 0.0
        %v326 = vand.u32 %v229, 4294901760
        %v327 = vsub.f32 %v229, %v326
        %328 = vmatpush.msra.mxu0 %v327
        %v329 = vand.u32 %v226, 4294901760
        %v330 = vsub.f32 %v226, %v329
        %331 = vmatpush.msra.mxu0 %v330
        %v332 = vand.u32 %v223, 4294901760
        %v333 = vsub.f32 %v223, %v332
        %334 = vmatpush.msra.mxu0 %v333
        %v335 = vand.u32 %v220, 4294901760
        %v336 = vsub.f32 %v220, %v335
        %337 = vmatpush.msra.mxu0 %v336
        %v338 = vand.u32 %v242, 4294901760
        %v339 = vsub.f32 %v242, %v338
        %340 = vmatmul.f32.gmra.mxu0 %v339
        %v341 = vpop.f32.mrf.mxu0
        %v342 = vadd.f32 %v312, %v341
        %343 = vdwg.mxu0
        %344 = vmatpush.msra.mxu0 0.0
        %345 = vmatpush.msra.mxu0 0.0
        %346 = vmatpush.msra.mxu0 0.0
        %347 = vmatpush.msra.mxu0 0.0
        %348 = vmatpush.msra.mxu0 0.0
        %349 = vmatpush.msra.mxu0 0.0
        %350 = vmatpush.msra.mxu0 0.0
        %351 = vmatpush.msra.mxu0 0.0
        %352 = vmatpush.msra.mxu0 0.0
        %353 = vmatpush.msra.mxu0 0.0
        %354 = vmatpush.msra.mxu0 0.0
        %355 = vmatpush.msra.mxu0 0.0
        %v356 = vand.u32 %v229, 4294901760
        %357 = vmatpush.msra.mxu0 %v356
        %v358 = vand.u32 %v226, 4294901760
        %359 = vmatpush.msra.mxu0 %v358
        %v360 = vand.u32 %v223, 4294901760
        %361 = vmatpush.msra.mxu0 %v360
        %v362 = vand.u32 %v220, 4294901760
        %363 = vmatpush.msra.mxu0 %v362
        %v364 = vand.u32 %v242, 4294901760
        %v365 = vsub.f32 %v242, %v364
        %v366 = vand.u32 %v365, 4294901760
        %367 = vmatmul.f32.gmra.mxu0 %v366
        %v368 = vpop.f32.mrf.mxu0
        %v369 = vadd.f32 %v342, %v368
        %370 = vdwg.mxu0
        %371 = vmatpush.msra.mxu0 0.0
        %372 = vmatpush.msra.mxu0 0.0
        %373 = vmatpush.msra.mxu0 0.0
        %374 = vmatpush.msra.mxu0 0.0
        %375 = vmatpush.msra.mxu0 0.0
        %376 = vmatpush.msra.mxu0 0.0
        %377 = vmatpush.msra.mxu0 0.0
        %378 = vmatpush.msra.mxu0 0.0
        %379 = vmatpush.msra.mxu0 0.0
        %380 = vmatpush.msra.mxu0 0.0
        %381 = vmatpush.msra.mxu0 0.0
        %382 = vmatpush.msra.mxu0 0.0
        %v383 = vand.u32 %v229, 4294901760
        %v384 = vsub.f32 %v229, %v383
        %v385 = vand.u32 %v384, 4294901760
        %386 = vmatpush.msra.mxu0 %v385
        %v387 = vand.u32 %v226, 4294901760
        %v388 = vsub.f32 %v226, %v387
        %v389 = vand.u32 %v388, 4294901760
        %390 = vmatpush.msra.mxu0 %v389
        %v391 = vand.u32 %v223, 4294901760
        %v392 = vsub.f32 %v223, %v391
        %v393 = vand.u32 %v392, 4294901760
        %394 = vmatpush.msra.mxu0 %v393
        %v395 = vand.u32 %v220, 4294901760
        %v396 = vsub.f32 %v220, %v395
        %v397 = vand.u32 %v396, 4294901760
        %398 = vmatpush.msra.mxu0 %v397
        %v399 = vand.u32 %v242, 4294901760
        %400 = vmatmul.f32.gmra.mxu0 %v399
        %v401 = vpop.f32.mrf.mxu0
        %v402 = vadd.f32 %v369, %v401
        %403 = vdwg.mxu0
        %404 = vmatpush.msra.mxu0 0.0
        %405 = vmatpush.msra.mxu0 0.0
        %406 = vmatpush.msra.mxu0 0.0
        %407 = vmatpush.msra.mxu0 0.0
        %408 = vmatpush.msra.mxu0 0.0
        %409 = vmatpush.msra.mxu0 0.0
        %410 = vmatpush.msra.mxu0 0.0
        %411 = vmatpush.msra.mxu0 0.0
        %412 = vmatpush.msra.mxu0 0.0
        %413 = vmatpush.msra.mxu0 0.0
        %414 = vmatpush.msra.mxu0 0.0
        %415 = vmatpush.msra.mxu0 0.0
        %v416 = vand.u32 %v229, 4294901760
        %417 = vmatpush.msra.mxu0 %v416
        %v418 = vand.u32 %v226, 4294901760
        %419 = vmatpush.msra.mxu0 %v418
        %v420 = vand.u32 %v223, 4294901760
        %421 = vmatpush.msra.mxu0 %v420
        %v422 = vand.u32 %v220, 4294901760
        %423 = vmatpush.msra.mxu0 %v422
        %v424 = vand.u32 %v242, 4294901760
        %425 = vmatmul.f32.gmra.mxu0 %v424
        %v426 = vpop.f32.mrf.mxu0
        %v427 = vadd.f32 %v402, %v426
        %428 = vdwg.mxu0
        %429 = vmatpush.msra.mxu0 0.0
        %430 = vmatpush.msra.mxu0 0.0
        %431 = vmatpush.msra.mxu0 0.0
        %432 = vmatpush.msra.mxu0 0.0
        %433 = vmatpush.msra.mxu0 0.0
        %434 = vmatpush.msra.mxu0 0.0
        %435 = vmatpush.msra.mxu0 0.0
        %436 = vmatpush.msra.mxu0 0.0
        %437 = vmatpush.msra.mxu0 0.0
        %438 = vmatpush.msra.mxu0 0.0
        %439 = vmatpush.msra.mxu0 0.0
        %440 = vmatpush.msra.mxu0 0.0
        %v441 = vand.u32 %v230, 4294901760
        %442 = vmatpush.msra.mxu0 %v441
        %v443 = vand.u32 %v227, 4294901760
        %444 = vmatpush.msra.mxu0 %v443
        %v445 = vand.u32 %v224, 4294901760
        %446 = vmatpush.msra.mxu0 %v445
        %v447 = vand.u32 %v221, 4294901760
        %448 = vmatpush.msra.mxu0 %v447
        %v449 = vand.u32 %v242, 4294901760
        %v450 = vsub.f32 %v242, %v449
        %v451 = vand.u32 %v450, 4294901760
        %v452 = vsub.f32 %v450, %v451
        %v453 = vand.u32 %v452, 4294901760
        %454 = vmatmul.f32.gmra.mxu0 %v453
        %v455 = vpop.f32.mrf.mxu0
        %v456 = vadd.f32 %v235, %v455
        %457 = vdwg.mxu0
        %458 = vmatpush.msra.mxu0 0.0
        %459 = vmatpush.msra.mxu0 0.0
        %460 = vmatpush.msra.mxu0 0.0
        %461 = vmatpush.msra.mxu0 0.0
        %462 = vmatpush.msra.mxu0 0.0
        %463 = vmatpush.msra.mxu0 0.0
        %464 = vmatpush.msra.mxu0 0.0
        %465 = vmatpush.msra.mxu0 0.0
        %466 = vmatpush.msra.mxu0 0.0
        %467 = vmatpush.msra.mxu0 0.0
        %468 = vmatpush.msra.mxu0 0.0
        %469 = vmatpush.msra.mxu0 0.0
        %v470 = vand.u32 %v230, 4294901760
        %v471 = vsub.f32 %v230, %v470
        %v472 = vand.u32 %v471, 4294901760
        %v473 = vsub.f32 %v471, %v472
        %v474 = vand.u32 %v473, 4294901760
        %475 = vmatpush.msra.mxu0 %v474
        %v476 = vand.u32 %v227, 4294901760
        %v477 = vsub.f32 %v227, %v476
        %v478 = vand.u32 %v477, 4294901760
        %v479 = vsub.f32 %v477, %v478
        %v480 = vand.u32 %v479, 4294901760
        %481 = vmatpush.msra.mxu0 %v480
        %v482 = vand.u32 %v224, 4294901760
        %v483 = vsub.f32 %v224, %v482
        %v484 = vand.u32 %v483, 4294901760
        %v485 = vsub.f32 %v483, %v484
        %v486 = vand.u32 %v485, 4294901760
        %487 = vmatpush.msra.mxu0 %v486
        %v488 = vand.u32 %v221, 4294901760
        %v489 = vsub.f32 %v221, %v488
        %v490 = vand.u32 %v489, 4294901760
        %v491 = vsub.f32 %v489, %v490
        %v492 = vand.u32 %v491, 4294901760
        %493 = vmatpush.msra.mxu0 %v492
        %v494 = vand.u32 %v242, 4294901760
        %495 = vmatmul.f32.gmra.mxu0 %v494
        %v496 = vpop.f32.mrf.mxu0
        %v497 = vadd.f32 %v456, %v496
        %498 = vdwg.mxu0
        %499 = vmatpush.msra.mxu0 0.0
        %500 = vmatpush.msra.mxu0 0.0
        %501 = vmatpush.msra.mxu0 0.0
        %502 = vmatpush.msra.mxu0 0.0
        %503 = vmatpush.msra.mxu0 0.0
        %504 = vmatpush.msra.mxu0 0.0
        %505 = vmatpush.msra.mxu0 0.0
        %506 = vmatpush.msra.mxu0 0.0
        %507 = vmatpush.msra.mxu0 0.0
        %508 = vmatpush.msra.mxu0 0.0
        %509 = vmatpush.msra.mxu0 0.0
        %510 = vmatpush.msra.mxu0 0.0
        %v511 = vand.u32 %v230, 4294901760
        %v512 = vsub.f32 %v230, %v511
        %513 = vmatpush.msra.mxu0 %v512
        %v514 = vand.u32 %v227, 4294901760
        %v515 = vsub.f32 %v227, %v514
        %516 = vmatpush.msra.mxu0 %v515
        %v517 = vand.u32 %v224, 4294901760
        %v518 = vsub.f32 %v224, %v517
        %519 = vmatpush.msra.mxu0 %v518
        %v520 = vand.u32 %v221, 4294901760
        %v521 = vsub.f32 %v221, %v520
        %522 = vmatpush.msra.mxu0 %v521
        %v523 = vand.u32 %v242, 4294901760
        %v524 = vsub.f32 %v242, %v523
        %525 = vmatmul.f32.gmra.mxu0 %v524
        %v526 = vpop.f32.mrf.mxu0
        %v527 = vadd.f32 %v497, %v526
        %528 = vdwg.mxu0
        %529 = vmatpush.msra.mxu0 0.0
        %530 = vmatpush.msra.mxu0 0.0
        %531 = vmatpush.msra.mxu0 0.0
        %532 = vmatpush.msra.mxu0 0.0
        %533 = vmatpush.msra.mxu0 0.0
        %534 = vmatpush.msra.mxu0 0.0
        %535 = vmatpush.msra.mxu0 0.0
        %536 = vmatpush.msra.mxu0 0.0
        %537 = vmatpush.msra.mxu0 0.0
        %538 = vmatpush.msra.mxu0 0.0
        %539 = vmatpush.msra.mxu0 0.0
        %540 = vmatpush.msra.mxu0 0.0
        %v541 = vand.u32 %v230, 4294901760
        %542 = vmatpush.msra.mxu0 %v541
        %v543 = vand.u32 %v227, 4294901760
        %544 = vmatpush.msra.mxu0 %v543
        %v545 = vand.u32 %v224, 4294901760
        %546 = vmatpush.msra.mxu0 %v545
        %v547 = vand.u32 %v221, 4294901760
        %548 = vmatpush.msra.mxu0 %v547
        %v549 = vand.u32 %v242, 4294901760
        %v550 = vsub.f32 %v242, %v549
        %v551 = vand.u32 %v550, 4294901760
        %552 = vmatmul.f32.gmra.mxu0 %v551
        %v553 = vpop.f32.mrf.mxu0
        %v554 = vadd.f32 %v527, %v553
        %555 = vdwg.mxu0
        %556 = vmatpush.msra.mxu0 0.0
        %557 = vmatpush.msra.mxu0 0.0
        %558 = vmatpush.msra.mxu0 0.0
        %559 = vmatpush.msra.mxu0 0.0
        %560 = vmatpush.msra.mxu0 0.0
        %561 = vmatpush.msra.mxu0 0.0
        %562 = vmatpush.msra.mxu0 0.0
        %563 = vmatpush.msra.mxu0 0.0
        %564 = vmatpush.msra.mxu0 0.0
        %565 = vmatpush.msra.mxu0 0.0
        %566 = vmatpush.msra.mxu0 0.0
        %567 = vmatpush.msra.mxu0 0.0
        %v568 = vand.u32 %v230, 4294901760
        %v569 = vsub.f32 %v230, %v568
        %v570 = vand.u32 %v569, 4294901760
        %571 = vmatpush.msra.mxu0 %v570
        %v572 = vand.u32 %v227, 4294901760
        %v573 = vsub.f32 %v227, %v572
        %v574 = vand.u32 %v573, 4294901760
        %575 = vmatpush.msra.mxu0 %v574
        %v576 = vand.u32 %v224, 4294901760
        %v577 = vsub.f32 %v224, %v576
        %v578 = vand.u32 %v577, 4294901760
        %579 = vmatpush.msra.mxu0 %v578
        %v580 = vand.u32 %v221, 4294901760
        %v581 = vsub.f32 %v221, %v580
        %v582 = vand.u32 %v581, 4294901760
        %583 = vmatpush.msra.mxu0 %v582
        %v584 = vand.u32 %v242, 4294901760
        %585 = vmatmul.f32.gmra.mxu0 %v584
        %v586 = vpop.f32.mrf.mxu0
        %v587 = vadd.f32 %v554, %v586
        %588 = vdwg.mxu0
        %589 = vmatpush.msra.mxu0 0.0
        %590 = vmatpush.msra.mxu0 0.0
        %591 = vmatpush.msra.mxu0 0.0
        %592 = vmatpush.msra.mxu0 0.0
        %593 = vmatpush.msra.mxu0 0.0
        %594 = vmatpush.msra.mxu0 0.0
        %595 = vmatpush.msra.mxu0 0.0
        %596 = vmatpush.msra.mxu0 0.0
        %597 = vmatpush.msra.mxu0 0.0
        %598 = vmatpush.msra.mxu0 0.0
        %599 = vmatpush.msra.mxu0 0.0
        %600 = vmatpush.msra.mxu0 0.0
        %v601 = vand.u32 %v230, 4294901760
        %602 = vmatpush.msra.mxu0 %v601
        %v603 = vand.u32 %v227, 4294901760
        %604 = vmatpush.msra.mxu0 %v603
        %v605 = vand.u32 %v224, 4294901760
        %606 = vmatpush.msra.mxu0 %v605
        %v607 = vand.u32 %v221, 4294901760
        %608 = vmatpush.msra.mxu0 %v607
        %v609 = vand.u32 %v242, 4294901760
        %610 = vmatmul.f32.gmra.mxu0 %v609
        %v611 = vpop.f32.mrf.mxu0
        %v612 = vadd.f32 %v587, %v611
        %613 = vdwg.mxu0
        %614 = vmatpush.msra.mxu0 0.0
        %615 = vmatpush.msra.mxu0 0.0
        %616 = vmatpush.msra.mxu0 0.0
        %617 = vmatpush.msra.mxu0 0.0
        %618 = vmatpush.msra.mxu0 0.0
        %619 = vmatpush.msra.mxu0 0.0
        %620 = vmatpush.msra.mxu0 0.0
        %621 = vmatpush.msra.mxu0 0.0
        %622 = vmatpush.msra.mxu0 0.0
        %623 = vmatpush.msra.mxu0 0.0
        %624 = vmatpush.msra.mxu0 0.0
        %625 = vmatpush.msra.mxu0 0.0
        %v626 = vand.u32 %v231, 4294901760
        %627 = vmatpush.msra.mxu0 %v626
        %v628 = vand.u32 %v228, 4294901760
        %629 = vmatpush.msra.mxu0 %v628
        %v630 = vand.u32 %v225, 4294901760
        %631 = vmatpush.msra.mxu0 %v630
        %v632 = vand.u32 %v222, 4294901760
        %633 = vmatpush.msra.mxu0 %v632
        %v634 = vand.u32 %v242, 4294901760
        %v635 = vsub.f32 %v242, %v634
        %v636 = vand.u32 %v635, 4294901760
        %v637 = vsub.f32 %v635, %v636
        %v638 = vand.u32 %v637, 4294901760
        %639 = vmatmul.f32.gmra.mxu0 %v638
        %v640 = vpop.f32.mrf.mxu0
        %v641 = vadd.f32 %v236, %v640
        %642 = vdwg.mxu0
        %643 = vmatpush.msra.mxu0 0.0
        %644 = vmatpush.msra.mxu0 0.0
        %645 = vmatpush.msra.mxu0 0.0
        %646 = vmatpush.msra.mxu0 0.0
        %647 = vmatpush.msra.mxu0 0.0
        %648 = vmatpush.msra.mxu0 0.0
        %649 = vmatpush.msra.mxu0 0.0
        %650 = vmatpush.msra.mxu0 0.0
        %651 = vmatpush.msra.mxu0 0.0
        %652 = vmatpush.msra.mxu0 0.0
        %653 = vmatpush.msra.mxu0 0.0
        %654 = vmatpush.msra.mxu0 0.0
        %v655 = vand.u32 %v231, 4294901760
        %v656 = vsub.f32 %v231, %v655
        %v657 = vand.u32 %v656, 4294901760
        %v658 = vsub.f32 %v656, %v657
        %v659 = vand.u32 %v658, 4294901760
        %660 = vmatpush.msra.mxu0 %v659
        %v661 = vand.u32 %v228, 4294901760
        %v662 = vsub.f32 %v228, %v661
        %v663 = vand.u32 %v662, 4294901760
        %v664 = vsub.f32 %v662, %v663
        %v665 = vand.u32 %v664, 4294901760
        %666 = vmatpush.msra.mxu0 %v665
        %v667 = vand.u32 %v225, 4294901760
        %v668 = vsub.f32 %v225, %v667
        %v669 = vand.u32 %v668, 4294901760
        %v670 = vsub.f32 %v668, %v669
        %v671 = vand.u32 %v670, 4294901760
        %672 = vmatpush.msra.mxu0 %v671
        %v673 = vand.u32 %v222, 4294901760
        %v674 = vsub.f32 %v222, %v673
        %v675 = vand.u32 %v674, 4294901760
        %v676 = vsub.f32 %v674, %v675
        %v677 = vand.u32 %v676, 4294901760
        %678 = vmatpush.msra.mxu0 %v677
        %v679 = vand.u32 %v242, 4294901760
        %680 = vmatmul.f32.gmra.mxu0 %v679
        %v681 = vpop.f32.mrf.mxu0
        %v682 = vadd.f32 %v641, %v681
        %683 = vdwg.mxu0
        %684 = vmatpush.msra.mxu0 0.0
        %685 = vmatpush.msra.mxu0 0.0
        %686 = vmatpush.msra.mxu0 0.0
        %687 = vmatpush.msra.mxu0 0.0
        %688 = vmatpush.msra.mxu0 0.0
        %689 = vmatpush.msra.mxu0 0.0
        %690 = vmatpush.msra.mxu0 0.0
        %691 = vmatpush.msra.mxu0 0.0
        %692 = vmatpush.msra.mxu0 0.0
        %693 = vmatpush.msra.mxu0 0.0
        %694 = vmatpush.msra.mxu0 0.0
        %695 = vmatpush.msra.mxu0 0.0
        %v696 = vand.u32 %v231, 4294901760
        %v697 = vsub.f32 %v231, %v696
        %698 = vmatpush.msra.mxu0 %v697
        %v699 = vand.u32 %v228, 4294901760
        %v700 = vsub.f32 %v228, %v699
        %701 = vmatpush.msra.mxu0 %v700
        %v702 = vand.u32 %v225, 4294901760
        %v703 = vsub.f32 %v225, %v702
        %704 = vmatpush.msra.mxu0 %v703
        %v705 = vand.u32 %v222, 4294901760
        %v706 = vsub.f32 %v222, %v705
        %707 = vmatpush.msra.mxu0 %v706
        %v708 = vand.u32 %v242, 4294901760
        %v709 = vsub.f32 %v242, %v708
        %710 = vmatmul.f32.gmra.mxu0 %v709
        %v711 = vpop.f32.mrf.mxu0
        %v712 = vadd.f32 %v682, %v711
        %713 = vdwg.mxu0
        %714 = vmatpush.msra.mxu0 0.0
        %715 = vmatpush.msra.mxu0 0.0
        %716 = vmatpush.msra.mxu0 0.0
        %717 = vmatpush.msra.mxu0 0.0
        %718 = vmatpush.msra.mxu0 0.0
        %719 = vmatpush.msra.mxu0 0.0
        %720 = vmatpush.msra.mxu0 0.0
        %721 = vmatpush.msra.mxu0 0.0
        %722 = vmatpush.msra.mxu0 0.0
        %723 = vmatpush.msra.mxu0 0.0
        %724 = vmatpush.msra.mxu0 0.0
        %725 = vmatpush.msra.mxu0 0.0
        %v726 = vand.u32 %v231, 4294901760
        %727 = vmatpush.msra.mxu0 %v726
        %v728 = vand.u32 %v228, 4294901760
        %729 = vmatpush.msra.mxu0 %v728
        %v730 = vand.u32 %v225, 4294901760
        %731 = vmatpush.msra.mxu0 %v730
        %v732 = vand.u32 %v222, 4294901760
        %733 = vmatpush.msra.mxu0 %v732
        %v734 = vand.u32 %v242, 4294901760
        %v735 = vsub.f32 %v242, %v734
        %v736 = vand.u32 %v735, 4294901760
        %737 = vmatmul.f32.gmra.mxu0 %v736
        %v738 = vpop.f32.mrf.mxu0
        %v739 = vadd.f32 %v712, %v738
        %740 = vdwg.mxu0
        %741 = vmatpush.msra.mxu0 0.0
        %742 = vmatpush.msra.mxu0 0.0
        %743 = vmatpush.msra.mxu0 0.0
        %744 = vmatpush.msra.mxu0 0.0
        %745 = vmatpush.msra.mxu0 0.0
        %746 = vmatpush.msra.mxu0 0.0
        %747 = vmatpush.msra.mxu0 0.0
        %748 = vmatpush.msra.mxu0 0.0
        %749 = vmatpush.msra.mxu0 0.0
        %750 = vmatpush.msra.mxu0 0.0
        %751 = vmatpush.msra.mxu0 0.0
        %752 = vmatpush.msra.mxu0 0.0
        %v753 = vand.u32 %v231, 4294901760
        %v754 = vsub.f32 %v231, %v753
        %v755 = vand.u32 %v754, 4294901760
        %756 = vmatpush.msra.mxu0 %v755
        %v757 = vand.u32 %v228, 4294901760
        %v758 = vsub.f32 %v228, %v757
        %v759 = vand.u32 %v758, 4294901760
        %760 = vmatpush.msra.mxu0 %v759
        %v761 = vand.u32 %v225, 4294901760
        %v762 = vsub.f32 %v225, %v761
        %v763 = vand.u32 %v762, 4294901760
        %764 = vmatpush.msra.mxu0 %v763
        %v765 = vand.u32 %v222, 4294901760
        %v766 = vsub.f32 %v222, %v765
        %v767 = vand.u32 %v766, 4294901760
        %768 = vmatpush.msra.mxu0 %v767
        %v769 = vand.u32 %v242, 4294901760
        %770 = vmatmul.f32.gmra.mxu0 %v769
        %v771 = vpop.f32.mrf.mxu0
        %v772 = vadd.f32 %v739, %v771
        %773 = vdwg.mxu0
        %774 = vmatpush.msra.mxu0 0.0
        %775 = vmatpush.msra.mxu0 0.0
        %776 = vmatpush.msra.mxu0 0.0
        %777 = vmatpush.msra.mxu0 0.0
        %778 = vmatpush.msra.mxu0 0.0
        %779 = vmatpush.msra.mxu0 0.0
        %780 = vmatpush.msra.mxu0 0.0
        %781 = vmatpush.msra.mxu0 0.0
        %782 = vmatpush.msra.mxu0 0.0
        %783 = vmatpush.msra.mxu0 0.0
        %784 = vmatpush.msra.mxu0 0.0
        %785 = vmatpush.msra.mxu0 0.0
        %v786 = vand.u32 %v231, 4294901760
        %787 = vmatpush.msra.mxu0 %v786
        %v788 = vand.u32 %v228, 4294901760
        %789 = vmatpush.msra.mxu0 %v788
        %v790 = vand.u32 %v225, 4294901760
        %791 = vmatpush.msra.mxu0 %v790
        %v792 = vand.u32 %v222, 4294901760
        %793 = vmatpush.msra.mxu0 %v792
        %v794 = vand.u32 %v242, 4294901760
        %795 = vmatmul.f32.gmra.mxu0 %v794
        %v796 = vpop.f32.mrf.mxu0
        %v797 = vadd.f32 %v772, %v796
        %798 = vdwg.mxu0
        %799 = vmatpush.xpose.msra.mxu0 0.0
        %800 = vmatpush.xpose.msra.mxu0 0.0
        %801 = vmatpush.xpose.msra.mxu0 0.0
        %802 = vmatpush.xpose.msra.mxu0 0.0
        %803 = vmatpush.xpose.msra.mxu0 0.0
        %804 = vmatpush.xpose.msra.mxu0 0.0
        %805 = vmatpush.xpose.msra.mxu0 0.0
        %806 = vmatpush.xpose.msra.mxu0 0.0
        %807 = vmatpush.xpose.msra.mxu0 0.0
        %808 = vmatpush.xpose.msra.mxu0 0.0
        %809 = vmatpush.xpose.msra.mxu0 0.0
        %810 = vmatpush.xpose.msra.mxu0 0.0
        %811 = vmatpush.xpose.msra.mxu0 0.0
        %812 = vmatpush.xpose.msra.mxu0 0.0
        %813 = vmatpush.xpose.msra.mxu0 0.0
        %v814 = vand.u32 %v612, 4294901760
        %815 = vmatpush.xpose.msra.mxu0 %v814
        %v816 = vand.u32 %v427, 4294901760
        %v817 = vsub.f32 %v427, %v816
        %v818 = vand.u32 %v817, 4294901760
        %v819 = vsub.f32 %v817, %v818
        %v820 = vand.u32 %v819, 4294901760
        %821 = vmatmul.f32.gmra.mxu0 %v820
        %v822 = vpop.f32.mrf.mxu0
        %v823 = vadd.f32 0.0, %v822
        %824 = vdwg.mxu0
        %825 = vmatpush.xpose.msra.mxu0 0.0
        %826 = vmatpush.xpose.msra.mxu0 0.0
        %827 = vmatpush.xpose.msra.mxu0 0.0
        %828 = vmatpush.xpose.msra.mxu0 0.0
        %829 = vmatpush.xpose.msra.mxu0 0.0
        %830 = vmatpush.xpose.msra.mxu0 0.0
        %831 = vmatpush.xpose.msra.mxu0 0.0
        %832 = vmatpush.xpose.msra.mxu0 0.0
        %833 = vmatpush.xpose.msra.mxu0 0.0
        %834 = vmatpush.xpose.msra.mxu0 0.0
        %835 = vmatpush.xpose.msra.mxu0 0.0
        %836 = vmatpush.xpose.msra.mxu0 0.0
        %837 = vmatpush.xpose.msra.mxu0 0.0
        %838 = vmatpush.xpose.msra.mxu0 0.0
        %839 = vmatpush.xpose.msra.mxu0 0.0
        %v840 = vand.u32 %v612, 4294901760
        %v841 = vsub.f32 %v612, %v840
        %v842 = vand.u32 %v841, 4294901760
        %v843 = vsub.f32 %v841, %v842
        %v844 = vand.u32 %v843, 4294901760
        %845 = vmatpush.xpose.msra.mxu0 %v844
        %v846 = vand.u32 %v427, 4294901760
        %847 = vmatmul.f32.gmra.mxu0 %v846
        %v848 = vpop.f32.mrf.mxu0
        %v849 = vadd.f32 %v823, %v848
        %850 = vdwg.mxu0
        %851 = vmatpush.xpose.msra.mxu0 0.0
        %852 = vmatpush.xpose.msra.mxu0 0.0
        %853 = vmatpush.xpose.msra.mxu0 0.0
        %854 = vmatpush.xpose.msra.mxu0 0.0
        %855 = vmatpush.xpose.msra.mxu0 0.0
        %856 = vmatpush.xpose.msra.mxu0 0.0
        %857 = vmatpush.xpose.msra.mxu0 0.0
        %858 = vmatpush.xpose.msra.mxu0 0.0
        %859 = vmatpush.xpose.msra.mxu0 0.0
        %860 = vmatpush.xpose.msra.mxu0 0.0
        %861 = vmatpush.xpose.msra.mxu0 0.0
        %862 = vmatpush.xpose.msra.mxu0 0.0
        %863 = vmatpush.xpose.msra.mxu0 0.0
        %864 = vmatpush.xpose.msra.mxu0 0.0
        %865 = vmatpush.xpose.msra.mxu0 0.0
        %v866 = vand.u32 %v612, 4294901760
        %v867 = vsub.f32 %v612, %v866
        %868 = vmatpush.xpose.msra.mxu0 %v867
        %v869 = vand.u32 %v427, 4294901760
        %v870 = vsub.f32 %v427, %v869
        %871 = vmatmul.f32.gmra.mxu0 %v870
        %v872 = vpop.f32.mrf.mxu0
        %v873 = vadd.f32 %v849, %v872
        %874 = vdwg.mxu0
        %875 = vmatpush.xpose.msra.mxu0 0.0
        %876 = vmatpush.xpose.msra.mxu0 0.0
        %877 = vmatpush.xpose.msra.mxu0 0.0
        %878 = vmatpush.xpose.msra.mxu0 0.0
        %879 = vmatpush.xpose.msra.mxu0 0.0
        %880 = vmatpush.xpose.msra.mxu0 0.0
        %881 = vmatpush.xpose.msra.mxu0 0.0
        %882 = vmatpush.xpose.msra.mxu0 0.0
        %883 = vmatpush.xpose.msra.mxu0 0.0
        %884 = vmatpush.xpose.msra.mxu0 0.0
        %885 = vmatpush.xpose.msra.mxu0 0.0
        %886 = vmatpush.xpose.msra.mxu0 0.0
        %887 = vmatpush.xpose.msra.mxu0 0.0
        %888 = vmatpush.xpose.msra.mxu0 0.0
        %889 = vmatpush.xpose.msra.mxu0 0.0
        %v890 = vand.u32 %v612, 4294901760
        %891 = vmatpush.xpose.msra.mxu0 %v890
        %v892 = vand.u32 %v427, 4294901760
        %v893 = vsub.f32 %v427, %v892
        %v894 = vand.u32 %v893, 4294901760
        %895 = vmatmul.f32.gmra.mxu0 %v894
        %v896 = vpop.f32.mrf.mxu0
        %v897 = vadd.f32 %v873, %v896
        %898 = vdwg.mxu0
        %899 = vmatpush.xpose.msra.mxu0 0.0
        %900 = vmatpush.xpose.msra.mxu0 0.0
        %901 = vmatpush.xpose.msra.mxu0 0.0
        %902 = vmatpush.xpose.msra.mxu0 0.0
        %903 = vmatpush.xpose.msra.mxu0 0.0
        %904 = vmatpush.xpose.msra.mxu0 0.0
        %905 = vmatpush.xpose.msra.mxu0 0.0
        %906 = vmatpush.xpose.msra.mxu0 0.0
        %907 = vmatpush.xpose.msra.mxu0 0.0
        %908 = vmatpush.xpose.msra.mxu0 0.0
        %909 = vmatpush.xpose.msra.mxu0 0.0
        %910 = vmatpush.xpose.msra.mxu0 0.0
        %911 = vmatpush.xpose.msra.mxu0 0.0
        %912 = vmatpush.xpose.msra.mxu0 0.0
        %913 = vmatpush.xpose.msra.mxu0 0.0
        %v914 = vand.u32 %v612, 4294901760
        %v915 = vsub.f32 %v612, %v914
        %v916 = vand.u32 %v915, 4294901760
        %917 = vmatpush.xpose.msra.mxu0 %v916
        %v918 = vand.u32 %v427, 4294901760
        %919 = vmatmul.f32.gmra.mxu0 %v918
        %v920 = vpop.f32.mrf.mxu0
        %v921 = vadd.f32 %v897, %v920
        %922 = vdwg.mxu0
        %923 = vmatpush.xpose.msra.mxu0 0.0
        %924 = vmatpush.xpose.msra.mxu0 0.0
        %925 = vmatpush.xpose.msra.mxu0 0.0
        %926 = vmatpush.xpose.msra.mxu0 0.0
        %927 = vmatpush.xpose.msra.mxu0 0.0
        %928 = vmatpush.xpose.msra.mxu0 0.0
        %929 = vmatpush.xpose.msra.mxu0 0.0
        %930 = vmatpush.xpose.msra.mxu0 0.0
        %931 = vmatpush.xpose.msra.mxu0 0.0
        %932 = vmatpush.xpose.msra.mxu0 0.0
        %933 = vmatpush.xpose.msra.mxu0 0.0
        %934 = vmatpush.xpose.msra.mxu0 0.0
        %935 = vmatpush.xpose.msra.mxu0 0.0
        %936 = vmatpush.xpose.msra.mxu0 0.0
        %937 = vmatpush.xpose.msra.mxu0 0.0
        %v938 = vand.u32 %v612, 4294901760
        %939 = vmatpush.xpose.msra.mxu0 %v938
        %v940 = vand.u32 %v427, 4294901760
        %941 = vmatmul.f32.gmra.mxu0 %v940
        %v942 = vpop.f32.mrf.mxu0
        %v943 = vadd.f32 %v921, %v942
        %944 = vdwg.mxu0
        %vm945 = vcmask 64512
        %v946 = vsel %vm945, %v943, -inf
        %947 = vmax.xlane.f32.xlu0 %v946
        %v948 = vpop.xlane.xlu0 %947
        %v949 = vsub.f32 %v943, %v948
        %v950 = vmul.f32 %v949, 1.442695
        %v951 = vpow.pop %v950
        %v952 = vsel %vm945, %v951, 0.0
        %953 = vadd.xlane.f32.xlu0 %v952
        %v954 = vpop.xlane.xlu0 %953
        %v956 = vsel %vm945, %v951, 0
        %958 = vmatpush.msra.mxu0 0.0
        %959 = vmatpush.msra.mxu0 0.0
        %960 = vmatpush.msra.mxu0 0.0
        %961 = vmatpush.msra.mxu0 0.0
        %962 = vmatpush.msra.mxu0 0.0
        %963 = vmatpush.msra.mxu0 0.0
        %964 = vmatpush.msra.mxu0 0.0
        %965 = vmatpush.msra.mxu0 0.0
        %966 = vmatpush.msra.mxu0 0.0
        %967 = vmatpush.msra.mxu0 0.0
        %968 = vmatpush.msra.mxu0 0.0
        %969 = vmatpush.msra.mxu0 0.0
        %970 = vmatpush.msra.mxu0 0.0
        %971 = vmatpush.msra.mxu0 0.0
        %972 = vmatpush.msra.mxu0 0.0
        %v973 = vand.u32 %v797, 4294901760
        %974 = vmatpush.msra.mxu0 %v973
        %v975 = vand.u32 %v956, 4294901760
        %v976 = vsub.f32 %v956, %v975
        %v977 = vand.u32 %v976, 4294901760
        %v978 = vsub.f32 %v976, %v977
        %v979 = vand.u32 %v978, 4294901760
        %980 = vmatmul.f32.gmra.mxu0 %v979
        %v981 = vpop.f32.mrf.mxu0
        %v982 = vadd.f32 0.0, %v981
        %983 = vdwg.mxu0
        %984 = vmatpush.msra.mxu0 0.0
        %985 = vmatpush.msra.mxu0 0.0
        %986 = vmatpush.msra.mxu0 0.0
        %987 = vmatpush.msra.mxu0 0.0
        %988 = vmatpush.msra.mxu0 0.0
        %989 = vmatpush.msra.mxu0 0.0
        %990 = vmatpush.msra.mxu0 0.0
        %991 = vmatpush.msra.mxu0 0.0
        %992 = vmatpush.msra.mxu0 0.0
        %993 = vmatpush.msra.mxu0 0.0
        %994 = vmatpush.msra.mxu0 0.0
        %995 = vmatpush.msra.mxu0 0.0
        %996 = vmatpush.msra.mxu0 0.0
        %997 = vmatpush.msra.mxu0 0.0
        %998 = vmatpush.msra.mxu0 0.0
        %v999 = vand.u32 %v797, 4294901760
        %v1000 = vsub.f32 %v797, %v999
        %v1001 = vand.u32 %v1000, 4294901760
        %v1002 = vsub.f32 %v1000, %v1001
        %v1003 = vand.u32 %v1002, 4294901760
        %1004 = vmatpush.msra.mxu0 %v1003
        %v1005 = vand.u32 %v956, 4294901760
        %1006 = vmatmul.f32.gmra.mxu0 %v1005
        %v1007 = vpop.f32.mrf.mxu0
        %v1008 = vadd.f32 %v982, %v1007
        %1009 = vdwg.mxu0
        %1010 = vmatpush.msra.mxu0 0.0
        %1011 = vmatpush.msra.mxu0 0.0
        %1012 = vmatpush.msra.mxu0 0.0
        %1013 = vmatpush.msra.mxu0 0.0
        %1014 = vmatpush.msra.mxu0 0.0
        %1015 = vmatpush.msra.mxu0 0.0
        %1016 = vmatpush.msra.mxu0 0.0
        %1017 = vmatpush.msra.mxu0 0.0
        %1018 = vmatpush.msra.mxu0 0.0
        %1019 = vmatpush.msra.mxu0 0.0
        %1020 = vmatpush.msra.mxu0 0.0
        %1021 = vmatpush.msra.mxu0 0.0
        %1022 = vmatpush.msra.mxu0 0.0
        %1023 = vmatpush.msra.mxu0 0.0
        %1024 = vmatpush.msra.mxu0 0.0
        %v1025 = vand.u32 %v797, 4294901760
        %v1026 = vsub.f32 %v797, %v1025
        %1027 = vmatpush.msra.mxu0 %v1026
        %v1028 = vand.u32 %v956, 4294901760
        %v1029 = vsub.f32 %v956, %v1028
        %1030 = vmatmul.f32.gmra.mxu0 %v1029
        %v1031 = vpop.f32.mrf.mxu0
        %v1032 = vadd.f32 %v1008, %v1031
        %1033 = vdwg.mxu0
        %1034 = vmatpush.msra.mxu0 0.0
        %1035 = vmatpush.msra.mxu0 0.0
        %1036 = vmatpush.msra.mxu0 0.0
        %1037 = vmatpush.msra.mxu0 0.0
        %1038 = vmatpush.msra.mxu0 0.0
        %1039 = vmatpush.msra.mxu0 0.0
        %1040 = vmatpush.msra.mxu0 0.0
        %1041 = vmatpush.msra.mxu0 0.0
        %1042 = vmatpush.msra.mxu0 0.0
        %1043 = vmatpush.msra.mxu0 0.0
        %1044 = vmatpush.msra.mxu0 0.0
        %1045 = vmatpush.msra.mxu0 0.0
        %1046 = vmatpush.msra.mxu0 0.0
        %1047 = vmatpush.msra.mxu0 0.0
        %1048 = vmatpush.msra.mxu0 0.0
        %v1049 = vand.u32 %v797, 4294901760
        %1050 = vmatpush.msra.mxu0 %v1049
        %v1051 = vand.u32 %v956, 4294901760
        %v1052 = vsub.f32 %v956, %v1051
        %v1053 = vand.u32 %v1052, 4294901760
        %1054 = vmatmul.f32.gmra.mxu0 %v1053
        %v1055 = vpop.f32.mrf.mxu0
        %v1056 = vadd.f32 %v1032, %v1055
        %1057 = vdwg.mxu0
        %1058 = vmatpush.msra.mxu0 0.0
        %1059 = vmatpush.msra.mxu0 0.0
        %1060 = vmatpush.msra.mxu0 0.0
        %1061 = vmatpush.msra.mxu0 0.0
        %1062 = vmatpush.msra.mxu0 0.0
        %1063 = vmatpush.msra.mxu0 0.0
        %1064 = vmatpush.msra.mxu0 0.0
        %1065 = vmatpush.msra.mxu0 0.0
        %1066 = vmatpush.msra.mxu0 0.0
        %1067 = vmatpush.msra.mxu0 0.0
        %1068 = vmatpush.msra.mxu0 0.0
        %1069 = vmatpush.msra.mxu0 0.0
        %1070 = vmatpush.msra.mxu0 0.0
        %1071 = vmatpush.msra.mxu0 0.0
        %1072 = vmatpush.msra.mxu0 0.0
        %v1073 = vand.u32 %v797, 4294901760
        %v1074 = vsub.f32 %v797, %v1073
        %v1075 = vand.u32 %v1074, 4294901760
        %1076 = vmatpush.msra.mxu0 %v1075
        %v1077 = vand.u32 %v956, 4294901760
        %1078 = vmatmul.f32.gmra.mxu0 %v1077
        %v1079 = vpop.f32.mrf.mxu0
        %v1080 = vadd.f32 %v1056, %v1079
        %1081 = vdwg.mxu0
        %1082 = vmatpush.msra.mxu0 0.0
        %1083 = vmatpush.msra.mxu0 0.0
        %1084 = vmatpush.msra.mxu0 0.0
        %1085 = vmatpush.msra.mxu0 0.0
        %1086 = vmatpush.msra.mxu0 0.0
        %1087 = vmatpush.msra.mxu0 0.0
        %1088 = vmatpush.msra.mxu0 0.0
        %1089 = vmatpush.msra.mxu0 0.0
        %1090 = vmatpush.msra.mxu0 0.0
        %1091 = vmatpush.msra.mxu0 0.0
        %1092 = vmatpush.msra.mxu0 0.0
        %1093 = vmatpush.msra.mxu0 0.0
        %1094 = vmatpush.msra.mxu0 0.0
        %1095 = vmatpush.msra.mxu0 0.0
        %1096 = vmatpush.msra.mxu0 0.0
        %v1097 = vand.u32 %v797, 4294901760
        %1098 = vmatpush.msra.mxu0 %v1097
        %v1099 = vand.u32 %v956, 4294901760
        %1100 = vmatmul.f32.gmra.mxu0 %v1099
        %v1101 = vpop.f32.mrf.mxu0
        %v1102 = vadd.f32 %v1080, %v1101
        %1103 = vdwg.mxu0
        %v1104 = vrcp.pop %v954
        %v1105 = vmul.f32 %v954, %v1104
        %v1106 = vsub.f32 1.0, %v1105
        %v1107 = vmul.f32 %v1104, %v1106
        %v1108 = vadd.f32 %v1104, %v1107
        %vm1109 = vweird.f32 %v954
        %vm1110 = vweird.f32 %v1104
        %vm1111 = vmor %vm1109, %vm1110
        %v1112 = vsel %vm1111, %v1104, %v1108
        %v1113 = vand.u32 2147483647, %v954
        %vm1114 = vcmp.eq.f32.partialorder %v1113, 8.507059e+37
        %v1115 = vand.u32 %v954, 2147483648
        %v1116 = vor.u32 1.1754944e-38, %v1115
        %v1117 = vsel %vm1114, %v1116, %v1112
        %v1118 = vmul.f32 %v1102, %v1117
        %1119 = vst [vmem:[%s218] sm:$0xff] %v1118
        %s1120 = sand.u32 %s97, 1
        %s1121 = scalar_lea.sflag [#allocation4], %s1120
        %s1122 = sand.u32 %s97, 1
        %s1123 = smul.addr %s1122, 8
        %s1124 = scalar_lea.vmem [#allocation8], %s1123
        // Predicated region
        $region45: #{attention_forward.1} parent=31 // pred_check
          %p1125 = pneg %p107
        $region46: #{attention_forward.1} parent=31 // pred_check_branch
          %1127 = sbr.rel (%p1125) target = $region48
        $region47: #{attention_forward.1} parent=31 // pred_region
          %1129 = vsyncadd %s1121, 0
          %s1130 = smul.addr %s21, 8
          %s1131 = scalar_lea.hbm %s3, %s1130
          %s1133 = sshll.u32 %s1124, 4
          %s1134 = int_to_ptr.vmem [resolvable:$true] %s1133
          %s1135 = sshll.u32 %s1131, 4
          %s1136 = int_to_ptr.hbm [resolvable:$true] %s1135
          %1138 = dma.vmem_to_hbm [thread:$0]  %s1134, 128, %s1136, %s1121
        $region48: #{attention_forward.1} parent=31 // pred_fallthru
          _
      $region32: #{attention_forward.1} parent=5 // pred_fallthru
        _
      %p1139 = scmp.le.s32.totalorder 2, %s16
      // Predicated region
      $region49: #{attention_forward.1} parent=5 // pred_check
        %p1140 = pneg %p1139
      $region50: #{attention_forward.1} parent=5 // pred_check_branch
        %1142 = sbr.rel (%p1140) target = $region52
      $region51: #{attention_forward.1} parent=5 // pred_region
        %s1143 = ssub.s32 %s16, 2
        // Predicated region
        $region53: #{attention_forward.1} parent=51 // pred_check
          %p1144 = pneg %p113
        $region54: #{attention_forward.1} parent=51 // pred_check_branch
          %1146 = sbr.rel (%p1144) target = $region56
        $region55: #{attention_forward.1} parent=51 // pred_region
          %s1147 = sand.u32 %s98, 1
          %s1148 = scalar_lea.sflag [#allocation4], %s1147
          %s1149 = sand.u32 %s98, 1
          %s1150 = smul.addr %s1149, 8
          %s1151 = scalar_lea.vmem [#allocation8], %s1150
          %1153 = dma.done %s1148, 128
        $region56: #{attention_forward.1} parent=51 // pred_fallthru
          _
      $region52: #{attention_forward.1} parent=5 // pred_fallthru
        _
    $region6: #{attention_forward.1} parent=1 // loop_footer
      %s20 = sadd.s32 1, %s16
    $region7: #{attention_forward.1} parent=1 // loop_footer_branch
      %15 = sbr.rel target = $region3
    $region8: #{attention_forward.1} parent=1 // loop_exit
      _
    %1154 = vsyncpa [#allocation3], 1
    %s1155 = scalar_lea.sflag [#allocation3], 1
    %1156 = vsyncpa %s1155, 1
    %1157 = vsyncpa [#allocation6], 1
    %1158 = vsyncpa [#allocation4], 1
    %s1159 = scalar_lea.sflag [#allocation4], 1
    %1160 = vsyncpa %s1159, 1

</llo_original>
